<compile_context>
chip_gen: v5e
topology: v5e:2x2
jax: 0.10.0
libtpu: 0.0.40
codegen_flags: <defaults>
</compile_context>

<pallas_src>
import functools
import math

import jax
import jax.numpy as jnp
from jax.experimental import pallas as pl
from jax.experimental.pallas import tpu as pltpu

F32 = jnp.float32
BF16 = jnp.bfloat16


def _vmem_limit_bytes():
    """Per-generation scoped-VMEM budget, leaving headroom for compiler scratch."""
    mib = 1024 * 1024
    try:
        cap = pltpu.get_tpu_info().vmem_capacity_bytes
    except Exception:
        return 48 * mib                       # safe on every generation
    # ~96 MiB on v5e/v6e (128 MiB phys), ~40 MiB on v7x (64 MiB phys)
    return max(32 * mib, min(int(cap * 0.75), cap - 24 * mib, 100 * mib))


VMEM_LIMIT = _vmem_limit_bytes()

# preferred tile sizes (_pick always returns a divisor of the dim or the full dim)
TM_PREF = 512        # encoder matmul rows (sublane axis)
TN_PREF = 1024       # encoder matmul output lanes
TK_PREF = 512        # contraction tile
TM_HEAD_PREF = 1024  # classifier-head rows (amortizes streaming of the (H, V) weight)
TV_PREF = 512        # classifier-head vocab tile
TQ_PREF = 256        # flash-attention query rows
TKV_PREF = 512       # flash-attention key/value rows


def _pick(dim, pref, align):
    """Largest tile <= pref that divides `dim`, preferring 256-multiples (full-width
    passes on v6e/v7x 256x256 MXUs), then `align`-multiples; falls back to the full
    dimension (block == array is always legal)."""
    if dim <= pref:
        return dim
    for a in ((256, align) if align < 256 else (align,)):
        t = (min(pref, dim) // a) * a
        while t >= a:
            if dim % t == 0:
                return t
            t -= a
    return dim


# ----------------------------------------------------------------------------
# Tiled matmul (+ optional GELU epilogue)
# ----------------------------------------------------------------------------
def _linear_kernel(x_ref, w_ref, b_ref, o_ref, acc_ref, *, act):
    @pl.when(pl.program_id(2) == 0)
    def _():
        acc_ref[...] = jnp.zeros_like(acc_ref)

    acc_ref[...] += jnp.dot(x_ref[...], w_ref[...],
                            preferred_element_type=jnp.float32)

    @pl.when(pl.program_id(2) == pl.num_programs(2) - 1)
    def _():
        y = acc_ref[...] + b_ref[...]
        if act == "gelu":
            # TODO(synk): HF BERT uses exact (erf) GELU; tanh approximation used here.
            y = 0.5 * y * (1.0 + jnp.tanh(0.7978845608028654 *
                                          (y + 0.044715 * y * y * y)))
        o_ref[...] = y.astype(o_ref.dtype)


def linear(x, w, b, act=None, out_dtype=BF16):
    M, K = x.shape
    K2, N = w.shape
    assert K == K2
    tm = _pick(M, TM_PREF, 8)
    tn = _pick(N, TN_PREF, 128)
    tk = _pick(K, TK_PREF, 128)
    grid = (M // tm, N // tn, K // tk)
    return pl.pallas_call(
        functools.partial(_linear_kernel, act=act),
        grid=grid,
        in_specs=[
            pl.BlockSpec((tm, tk), lambda i, j, k: (i, k)),
            pl.BlockSpec((tk, tn), lambda i, j, k: (k, j)),
            pl.BlockSpec((1, tn), lambda i, j, k: (0, j)),
        ],
        out_specs=pl.BlockSpec((tm, tn), lambda i, j, k: (i, j)),
        out_shape=jax.ShapeDtypeStruct((M, N), out_dtype),
        scratch_shapes=[pltpu.VMEM((tm, tn), jnp.float32)],
        cost_estimate=pl.CostEstimate(
            flops=2 * M * N * K, transcendentals=0,
            bytes_accessed=(M * K + K * N) * 2 + M * N * 2),
        compiler_params=pltpu.CompilerParams(
            dimension_semantics=("parallel", "parallel", "arbitrary"),
            vmem_limit_bytes=VMEM_LIMIT),
    )(x.astype(BF16), w.astype(BF16), b.reshape(1, N).astype(F32))


# ----------------------------------------------------------------------------
# Tiled matmul with fused residual-add + LayerNorm epilogue (N = hidden, full)
# ----------------------------------------------------------------------------
def _linear_res_ln_kernel(x_ref, w_ref, b_ref, r_ref, g_ref, be_ref,
                          o_ref, acc_ref):
    @pl.when(pl.program_id(1) == 0)
    def _():
        acc_ref[...] = jnp.zeros_like(acc_ref)

    acc_ref[...] += jnp.dot(x_ref[...], w_ref[...],
                            preferred_element_type=jnp.float32)

    @pl.when(pl.program_id(1) == pl.num_programs(1) - 1)
    def _():
        y = acc_ref[...] + b_ref[...] + r_ref[...].astype(jnp.float32)
        mu = jnp.mean(y, axis=-1, keepdims=True)
        yc = y - mu
        var = jnp.mean(yc * yc, axis=-1, keepdims=True)
        o_ref[...] = (yc * jax.lax.rsqrt(var + 1e-12) * g_ref[...]
                      + be_ref[...]).astype(o_ref.dtype)


def linear_residual_layernorm(x, w, b, res, g, beta, out_dtype=BF16):
    M, K = x.shape
    K2, N = w.shape
    assert K == K2 and res.shape == (M, N)
    tm = _pick(M, TM_PREF, 8)
    tk = _pick(K, TK_PREF, 128)
    grid = (M // tm, K // tk)
    return pl.pallas_call(
        _linear_res_ln_kernel,
        grid=grid,
        in_specs=[
            pl.BlockSpec((tm, tk), lambda i, k: (i, k)),
            pl.BlockSpec((tk, N), lambda i, k: (k, 0)),
            pl.BlockSpec((1, N), lambda i, k: (0, 0)),
            pl.BlockSpec((tm, N), lambda i, k: (i, 0)),
            pl.BlockSpec((1, N), lambda i, k: (0, 0)),
            pl.BlockSpec((1, N), lambda i, k: (0, 0)),
        ],
        out_specs=pl.BlockSpec((tm, N), lambda i, k: (i, 0)),
        out_shape=jax.ShapeDtypeStruct((M, N), out_dtype),
        scratch_shapes=[pltpu.VMEM((tm, N), jnp.float32)],
        cost_estimate=pl.CostEstimate(
            flops=2 * M * N * K, transcendentals=0,
            bytes_accessed=(M * K + K * N + 2 * M * N) * 2),
        compiler_params=pltpu.CompilerParams(
            dimension_semantics=("parallel", "arbitrary"),
            vmem_limit_bytes=VMEM_LIMIT),
    )(x.astype(BF16), w.astype(BF16), b.reshape(1, N).astype(F32),
      res.astype(BF16), g.reshape(1, N).astype(F32),
      beta.reshape(1, N).astype(F32))


# ----------------------------------------------------------------------------
# Standalone LayerNorm (embeddings only), tiled over rows, bf16 in / f32 math
# ----------------------------------------------------------------------------
def _layernorm_kernel(x_ref, g_ref, b_ref, o_ref):
    x = x_ref[...].astype(jnp.float32)
    mu = jnp.mean(x, axis=-1, keepdims=True)
    xc = x - mu
    var = jnp.mean(xc * xc, axis=-1, keepdims=True)
    o_ref[...] = (xc * jax.lax.rsqrt(var + 1e-12) * g_ref[...]
                  + b_ref[...]).astype(o_ref.dtype)


def layernorm(x, g, b, out_dtype=BF16):
    M, H = x.shape
    tm = _pick(M, 1024, 8)
    return pl.pallas_call(
        _layernorm_kernel,
        grid=(M // tm,),
        in_specs=[pl.BlockSpec((tm, H), lambda i: (i, 0)),
                  pl.BlockSpec((1, H), lambda i: (0, 0)),
                  pl.BlockSpec((1, H), lambda i: (0, 0))],
        out_specs=pl.BlockSpec((tm, H), lambda i: (i, 0)),
        out_shape=jax.ShapeDtypeStruct((M, H), out_dtype),
        compiler_params=pltpu.CompilerParams(
            dimension_semantics=("parallel",),
            vmem_limit_bytes=VMEM_LIMIT),
    )(x.astype(BF16), g.reshape(1, H).astype(F32), b.reshape(1, H).astype(F32))


# ----------------------------------------------------------------------------
# Flash attention: grid (B, q_tile, kv_tile), online softmax, reads Q/K/V as
# column blocks of the fused [B*S, 3H] QKV buffer, writes ctx as [B*S, H].
# ----------------------------------------------------------------------------
def _flash_attn_kernel(q_ref, k_ref, v_ref, bias_ref, o_ref,
                       m_sc, l_sc, acc_sc, *, nh, dh, scale):
    kv_i = pl.program_id(2)

    @pl.when(kv_i == 0)
    def _():
        m_sc[...] = jnp.full_like(m_sc, -jnp.inf)
        l_sc[...] = jnp.zeros_like(l_sc)
        acc_sc[...] = jnp.zeros_like(acc_sc)

    bias = bias_ref[0]                                   # (1, tkv) additive mask, f32
    qk_dims = (((1,), (1,)), ((), ()))                   # contract q/k on head_dim

    for h in range(nh):                                  # static unroll over heads
        q_h = q_ref[:, h * dh:(h + 1) * dh]              # (tq,  dh) bf16
        k_h = k_ref[:, h * dh:(h + 1) * dh]              # (tkv, dh) bf16
        v_h = v_ref[:, h * dh:(h + 1) * dh]              # (tkv, dh) bf16
        s = jax.lax.dot_general(q_h, k_h, qk_dims,
                                preferred_element_type=jnp.float32)
        s = s * scale + bias                             # (tq, tkv)
        m_prev = m_sc[h]                                 # (tq, 1)
        m_new = jnp.maximum(m_prev, jnp.max(s, axis=-1, keepdims=True))
        alpha = jnp.exp(m_prev - m_new)
        p = jnp.exp(s - m_new)
        l_sc[h] = alpha * l_sc[h] + jnp.sum(p, axis=-1, keepdims=True)
        acc_sc[h] = alpha * acc_sc[h] + jnp.dot(
            p.astype(v_h.dtype), v_h, preferred_element_type=jnp.float32)
        m_sc[h] = m_new

    @pl.when(kv_i == pl.num_programs(2) - 1)
    def _():
        for h in range(nh):
            ctx = acc_sc[h] / l_sc[h]                    # exact softmax normalization
            o_ref[:, h * dh:(h + 1) * dh] = ctx.astype(o_ref.dtype)


def flash_attention(qkv, bias, *, batch, seq, heads, scale):
    """qkv: [B*S, 3H] bf16 (fused Q|K|V along columns); bias: [B, 1, S] f32.
    Returns the merged-head context as [B*S, H] bf16 (no relayout needed)."""
    M, threeH = qkv.shape
    H = threeH // 3
    dh = H // heads
    assert H % 128 == 0, "flash attention path requires hidden_size % 128 == 0"
    # TODO(synk): sequence lengths not divisible by 8 would need a masked last q-tile.
    tq = _pick(seq, TQ_PREF, 8)
    tkv = _pick(seq, TKV_PREF, 128)      # also the lane dim of the bias block
    nq = seq // tq
    nk = seq // tkv
    return pl.pallas_call(
        functools.partial(_flash_attn_kernel, nh=heads, dh=dh, scale=scale),
        grid=(batch, nq, nk),
        in_specs=[
            pl.BlockSpec((tq, H), lambda b, qi, ki: (b * nq + qi, 0)),    # Q cols
            pl.BlockSpec((tkv, H), lambda b, qi, ki: (b * nk + ki, 1)),   # K cols
            pl.BlockSpec((tkv, H), lambda b, qi, ki: (b * nk + ki, 2)),   # V cols
            pl.BlockSpec((1, 1, tkv), lambda b, qi, ki: (b, 0, ki)),
        ],
        out_specs=pl.BlockSpec((tq, H), lambda b, qi, ki: (b * nq + qi, 0)),
        out_shape=jax.ShapeDtypeStruct((M, H), BF16),
        scratch_shapes=[pltpu.VMEM((heads, tq, 1), jnp.float32),
                        pltpu.VMEM((heads, tq, 1), jnp.float32),
                        pltpu.VMEM((heads, tq, dh), jnp.float32)],
        cost_estimate=pl.CostEstimate(
            flops=4 * batch * heads * seq * seq * dh,
            transcendentals=batch * heads * seq * seq,
            bytes_accessed=4 * M * H * 2 + batch * seq * 4),
        compiler_params=pltpu.CompilerParams(
            dimension_semantics=("parallel", "parallel", "arbitrary"),
            vmem_limit_bytes=VMEM_LIMIT),
    )(qkv, qkv, qkv, bias)


# ----------------------------------------------------------------------------
# Classifier weight/bias padding so the vocab axis always tiles by 128
# ----------------------------------------------------------------------------
def _pad_vocab(w, b):
    H, V = w.shape
    Vp = ((V + 127) // 128) * 128
    if Vp != V:
        w = jnp.pad(w, ((0, 0), (0, Vp - V)))                       # zero weights
        b = jnp.pad(b, (0, Vp - V), constant_values=-1e30)          # -inf-ish logits
    return w, b


# ----------------------------------------------------------------------------
# Fused classifier + cross-entropy (vocab-tiled, online logsumexp, no one-hot)
# ----------------------------------------------------------------------------
def _ce_head_kernel(x_ref, w_ref, b_ref, y_ref, o_ref, m_sc, l_sc, p_sc, *, tv):
    vj = pl.program_id(1)

    @pl.when(vj == 0)
    def _():
        m_sc[...] = jnp.full_like(m_sc, -jnp.inf)
        l_sc[...] = jnp.zeros_like(l_sc)
        p_sc[...] = jnp.zeros_like(p_sc)

    logits = jnp.dot(x_ref[...], w_ref[...],
                     preferred_element_type=jnp.float32) + b_ref[...]
    labels = y_ref[...]                                        # (tm, 1) int32
    col = vj * tv + jax.lax.broadcasted_iota(jnp.int32, logits.shape, 1)

    m_new = jnp.maximum(m_sc[...], jnp.max(logits, axis=-1, keepdims=True))
    l_sc[...] = (l_sc[...] * jnp.exp(m_sc[...] - m_new)
                 + jnp.sum(jnp.exp(logits - m_new), axis=-1, keepdims=True))
    m_sc[...] = m_new
    p_sc[...] += jnp.sum(jnp.where(col == labels, logits, 0.0),
                         axis=-1, keepdims=True)

    @pl.when(vj == pl.num_programs(1) - 1)
    def _():
        lse = m_sc[...] + jnp.log(l_sc[...])
        valid = (labels != -1).astype(jnp.float32)
        o_ref[...] = (lse - p_sc[...]) * valid


def classifier_cross_entropy(x, w, b, labels):
    """Per-row NLL (0 for ignored rows), never materializing [M,V] logits."""
    M, H = x.shape
    _, V = w.shape                      # padded vocab (multiple of 128)
    tm = _pick(M, TM_HEAD_PREF, 8)
    tv = _pick(V, TV_PREF, 128)
    grid = (M // tm, V // tv)
    return pl.pallas_call(
        functools.partial(_ce_head_kernel, tv=tv),
        grid=grid,
        in_specs=[
            pl.BlockSpec((tm, H), lambda i, j: (i, 0)),
            pl.BlockSpec((H, tv), lambda i, j: (0, j)),
            pl.BlockSpec((1, tv), lambda i, j: (0, j)),
            pl.BlockSpec((tm, 1), lambda i, j: (i, 0)),
        ],
        out_specs=pl.BlockSpec((tm, 1), lambda i, j: (i, 0)),
        out_shape=jax.ShapeDtypeStruct((M, 1), jnp.float32),
        scratch_shapes=[pltpu.VMEM((tm, 1), jnp.float32)] * 3,
        cost_estimate=pl.CostEstimate(
            flops=2 * M * V * H, transcendentals=M * V,
            bytes_accessed=(M * H + H * V) * 2 + M * 8),
        compiler_params=pltpu.CompilerParams(
            dimension_semantics=("parallel", "arbitrary"),
            vmem_limit_bytes=VMEM_LIMIT),
    )(x.astype(BF16), w.astype(BF16), b.reshape(1, V).astype(F32),
      labels.reshape(M, 1).astype(jnp.int32))


# ----------------------------------------------------------------------------
# Fused classifier + softmax: pass 1 bf16 logits + online lse, pass 2 exp-normalize
# ----------------------------------------------------------------------------
def _logits_lse_kernel(x_ref, w_ref, b_ref, logits_ref, lse_ref, m_sc, l_sc):
    vj = pl.program_id(1)

    @pl.when(vj == 0)
    def _():
        m_sc[...] = jnp.full_like(m_sc, -jnp.inf)
        l_sc[...] = jnp.zeros_like(l_sc)

    logits = jnp.dot(x_ref[...], w_ref[...],
                     preferred_element_type=jnp.float32) + b_ref[...]
    logits_bf = logits.astype(logits_ref.dtype)          # bf16 HBM intermediate
    logits_ref[...] = logits_bf
    logits = logits_bf.astype(jnp.float32)               # lse from the stored values

    m_new = jnp.maximum(m_sc[...], jnp.max(logits, axis=-1, keepdims=True))
    l_sc[...] = (l_sc[...] * jnp.exp(m_sc[...] - m_new)
                 + jnp.sum(jnp.exp(logits - m_new), axis=-1, keepdims=True))
    m_sc[...] = m_new

    @pl.when(vj == pl.num_programs(1) - 1)
    def _():
        lse_ref[...] = m_sc[...] + jnp.log(l_sc[...])


def _exp_normalize_kernel(logits_ref, lse_ref, o_ref):
    o_ref[...] = jnp.exp(logits_ref[...].astype(jnp.float32) - lse_ref[...])


def classifier_softmax(x, w, b):
    """softmax(x @ w + b) over the (padded) vocab, f32 probs, bf16 logits round trip."""
    M, H = x.shape
    _, V = w.shape                      # padded vocab (multiple of 128)
    tm = _pick(M, TM_HEAD_PREF, 8)
    tv = _pick(V, TV_PREF, 128)
    grid = (M // tm, V // tv)

    logits, lse = pl.pallas_call(
        _logits_lse_kernel,
        grid=grid,
        in_specs=[
            pl.BlockSpec((tm, H), lambda i, j: (i, 0)),
            pl.BlockSpec((H, tv), lambda i, j: (0, j)),
            pl.BlockSpec((1, tv), lambda i, j: (0, j)),
        ],
        out_specs=(
            pl.BlockSpec((tm, tv), lambda i, j: (i, j)),
            pl.BlockSpec((tm, 1), lambda i, j: (i, 0)),
        ),
        out_shape=(
            jax.ShapeDtypeStruct((M, V), BF16),
            jax.ShapeDtypeStruct((M, 1), jnp.float32),
        ),
        scratch_shapes=[pltpu.VMEM((tm, 1), jnp.float32)] * 2,
        cost_estimate=pl.CostEstimate(
            flops=2 * M * V * H, transcendentals=M * V,
            bytes_accessed=(M * H + H * V + M * V) * 2),
        compiler_params=pltpu.CompilerParams(
            dimension_semantics=("parallel", "arbitrary"),
            vmem_limit_bytes=VMEM_LIMIT),
    )(x.astype(BF16), w.astype(BF16), b.reshape(1, V).astype(F32))

    probs = pl.pallas_call(
        _exp_normalize_kernel,
        grid=grid,
        in_specs=[
            pl.BlockSpec((tm, tv), lambda i, j: (i, j)),
            pl.BlockSpec((tm, 1), lambda i, j: (i, 0)),
        ],
        out_specs=pl.BlockSpec((tm, tv), lambda i, j: (i, j)),
        out_shape=jax.ShapeDtypeStruct((M, V), jnp.float32),
        compiler_params=pltpu.CompilerParams(
            dimension_semantics=("parallel", "parallel"),
            vmem_limit_bytes=VMEM_LIMIT),
    )(logits, lse)
    return probs


# ----------------------------------------------------------------------------
# Model (parameters + forward glue)
# ----------------------------------------------------------------------------
def init_params(key, cfg):
    H, I, V = cfg["hidden"], cfg["intermediate"], cfg["vocab"]

    def nrm(k, shape, dtype=F32):
        return (0.02 * jax.random.normal(k, shape, dtype=F32)).astype(dtype)

    keys = iter(jax.random.split(key, 8 + 8 * cfg["layers"]))
    cls_w, cls_b = _pad_vocab(nrm(next(keys), (H, V), BF16), jnp.zeros((V,), F32))
    p = {
        "word_emb": nrm(next(keys), (V, H)),
        "pos_emb": nrm(next(keys), (cfg["max_pos"], H)),
        "type_emb": nrm(next(keys), (cfg["type_vocab"], H)),
        "emb_ln_g": jnp.ones((H,), F32),
        "emb_ln_b": jnp.zeros((H,), F32),
        "cls_w": cls_w,                 # (H, vocab padded to multiple of 128)
        "cls_b": cls_b,
        "layers": [],
    }
    for _ in range(cfg["layers"]):
        p["layers"].append({
            # fused Q|K|V projection weights (H, 3H); matmul weights stored bf16
            "w_qkv": nrm(next(keys), (H, 3 * H), BF16),
            "b_qkv": jnp.zeros((3 * H,), F32),
            "wo": nrm(next(keys), (H, H), BF16), "bo": jnp.zeros((H,), F32),
            "ln1_g": jnp.ones((H,), F32), "ln1_b": jnp.zeros((H,), F32),
            "wi": nrm(next(keys), (H, I), BF16), "bi": jnp.zeros((I,), F32),
            "wf": nrm(next(keys), (I, H), BF16), "bf": jnp.zeros((H,), F32),
            "ln2_g": jnp.ones((H,), F32), "ln2_b": jnp.zeros((H,), F32),
        })
    return p


def language_model_forward(params, cfg, x, mask=None, y=None):
    """Mirrors LanguageModel.forward: CE loss if y is given, else softmax probs."""
    B, S = x.shape
    H, heads = cfg["hidden"], cfg["heads"]
    Dh = H // heads
    M = B * S

    # --- BERT embeddings (gathers/adds are XLA glue; LN is a Pallas kernel)
    # TODO(synk): token_type_ids assumed all-zero (type_emb[0]); matches original usage.
    h = (params["word_emb"][x]
         + params["pos_emb"][jnp.arange(S)][None, :, :]
         + params["type_emb"][0][None, None, :])
    h = layernorm(h.reshape(M, H), params["emb_ln_g"], params["emb_ln_b"])  # bf16 [M,H]

    mask_f = jnp.ones((B, S), F32) if mask is None else mask.astype(F32)
    bias = ((1.0 - mask_f) * (-1e9)).reshape(B, 1, S)      # additive, no per-head repeat
    scale = 1.0 / math.sqrt(Dh)

    # --- BERT encoder layers: 5 pallas_calls per layer, no XLA relayouts ---
    for lyr in params["layers"]:
        qkv = linear(h, lyr["w_qkv"], lyr["b_qkv"])                       # [M, 3H]
        ctx = flash_attention(qkv, bias, batch=B, seq=S,
                              heads=heads, scale=scale)                   # [M, H]
        h = linear_residual_layernorm(ctx, lyr["wo"], lyr["bo"],
                                      h, lyr["ln1_g"], lyr["ln1_b"])      # attn-out + LN1
        inter = linear(h, lyr["wi"], lyr["bi"], act="gelu")               # FFN up + GELU
        h = linear_residual_layernorm(inter, lyr["wf"], lyr["bf"],
                                      h, lyr["ln2_g"], lyr["ln2_b"])      # FFN down + LN2
    # (BertModel's pooler output is discarded by the PyTorch module; skipped.)

    if y is not None:
        labels = y.reshape(M).astype(jnp.int32)
        nll = classifier_cross_entropy(h, params["cls_w"], params["cls_b"], labels)
        valid = (labels != -1).astype(F32)
        return jnp.sum(nll[:, 0]) / jnp.maximum(jnp.sum(valid), 1.0)

    probs = classifier_softmax(h, params["cls_w"], params["cls_b"])       # [M, Vpad]
    return probs[:, :cfg["vocab"]].reshape(B, S, cfg["vocab"])


# ----------------------------------------------------------------------------
if __name__ == "__main__":
    cfg = dict(hidden=128, heads=4, layers=2, intermediate=256,
               vocab=250, max_pos=64, type_vocab=2)   # vocab=250 exercises 128-padding
    B, S = 2, 8

    key = jax.random.PRNGKey(0)
    kp, kx, ky = jax.random.split(key, 3)
    params = init_params(kp, cfg)

    x = jax.random.randint(kx, (B, S), 0, cfg["vocab"], dtype=jnp.int32)
    mask = jnp.ones((B, S), dtype=jnp.int32)
    y = jax.random.randint(ky, (B, S), 0, cfg["vocab"], dtype=jnp.int32)
    y = y.at[:, -1].set(-1)   # exercise ignore_index=-1

    probs = language_model_forward(params, cfg, x)                    # inference path
    loss = language_model_forward(params, cfg, x, mask=mask, y=y)     # training path
    jax.block_until_ready((probs, loss))

    assert probs.shape == (B, S, cfg["vocab"])
    assert bool(jnp.all(jnp.isfinite(probs))) and bool(jnp.isfinite(loss))
    assert bool(jnp.allclose(jnp.sum(probs, axis=-1), 1.0, atol=1e-4))
    print("KERNEL_OK")
</pallas_src>

<mosaic_0001>
module attributes {stable_mosaic.version = 11 : i64} {
  func.func @_layernorm_kernel(%arg0: i32, %arg1: memref<16x128xbf16, #tpu.memory_space<vmem>>, %arg2: memref<1x128xf32, #tpu.memory_space<vmem>>, %arg3: memref<1x128xf32, #tpu.memory_space<vmem>>, %arg4: memref<16x128xbf16, #tpu.memory_space<vmem>>) attributes {dimension_semantics = [#tpu.dimension_semantics<parallel>], iteration_bounds = array<i64: 1>, scalar_prefetch = 0 : i64, scratch_operands = 0 : i64, tpu.core_type = #tpu.core_type<tc>, window_params = [{transform_indices = @transform_0, window_bounds = array<i64: 16, 128>}, {pipeline_mode = #tpu.pipeline_mode<synchronous>, transform_indices = @transform_1, window_bounds = array<i64: 1, 128>}, {pipeline_mode = #tpu.pipeline_mode<synchronous>, transform_indices = @transform_2, window_bounds = array<i64: 1, 128>}, {transform_indices = @transform_3, window_bounds = array<i64: 16, 128>}]} {
    %c0 = arith.constant 0 : index
    %c0_0 = arith.constant 0 : index
    %0 = vector.load %arg1[%c0, %c0_0] : memref<16x128xbf16, #tpu.memory_space<vmem>>, vector<16x128xbf16>
    %1 = arith.extf %0 : vector<16x128xbf16> to vector<16x128xf32>
    %cst = arith.constant dense<0.000000e+00> : vector<16xf32>
    %2 = vector.multi_reduction <add>, %1, %cst [1] : vector<16x128xf32> to vector<16xf32>
    %3 = vector.shape_cast %2 : vector<16xf32> to vector<16x1xf32>
    %cst_1 = arith.constant 1.280000e+02 : f32
    %4 = vector.broadcast %cst_1 : f32 to vector<16x1xf32>
    %5 = arith.divf %3, %4 : vector<16x1xf32>
    %6 = vector.broadcast %5 : vector<16x1xf32> to vector<16x128xf32>
    %7 = arith.subf %1, %6 : vector<16x128xf32>
    %8 = arith.mulf %7, %7 : vector<16x128xf32>
    %cst_2 = arith.constant dense<0.000000e+00> : vector<16xf32>
    %9 = vector.multi_reduction <add>, %8, %cst_2 [1] : vector<16x128xf32> to vector<16xf32>
    %10 = vector.shape_cast %9 : vector<16xf32> to vector<16x1xf32>
    %cst_3 = arith.constant 1.280000e+02 : f32
    %11 = vector.broadcast %cst_3 : f32 to vector<16x1xf32>
    %12 = arith.divf %10, %11 : vector<16x1xf32>
    %cst_4 = arith.constant 9.99999996E-13 : f32
    %13 = vector.broadcast %cst_4 : f32 to vector<16x1xf32>
    %14 = arith.addf %12, %13 : vector<16x1xf32>
    %15 = math.rsqrt %14 : vector<16x1xf32>
    %16 = vector.broadcast %15 : vector<16x1xf32> to vector<16x128xf32>
    %17 = arith.mulf %7, %16 : vector<16x128xf32>
    %c0_5 = arith.constant 0 : index
    %c0_6 = arith.constant 0 : index
    %18 = vector.load %arg2[%c0_5, %c0_6] : memref<1x128xf32, #tpu.memory_space<vmem>>, vector<1x128xf32>
    %19 = vector.broadcast %18 : vector<1x128xf32> to vector<16x128xf32>
    %20 = arith.mulf %17, %19 : vector<16x128xf32>
    %c0_7 = arith.constant 0 : index
    %c0_8 = arith.constant 0 : index
    %21 = vector.load %arg3[%c0_7, %c0_8] : memref<1x128xf32, #tpu.memory_space<vmem>>, vector<1x128xf32>
    %22 = vector.broadcast %21 : vector<1x128xf32> to vector<16x128xf32>
    %23 = arith.addf %20, %22 : vector<16x128xf32>
    %24 = arith.truncf %23 : vector<16x128xf32> to vector<16x128xbf16>
    %c0_9 = arith.constant 0 : index
    %c0_10 = arith.constant 0 : index
    %25 = vector.load %arg4[%c0_9, %c0_10] : memref<16x128xbf16, #tpu.memory_space<vmem>>, vector<16x128xbf16>
    tpu.vector_store %arg4[%c0_9, %c0_10], %24 {strides = array<i32>} : memref<16x128xbf16, #tpu.memory_space<vmem>>, vector<16x128xbf16>,
    return
  }
  func.func @transform_0(%arg0: i32) -> (i32, i32) {
    %c0_i32 = arith.constant 0 : i32
    %c0_i32_0 = arith.constant 0 : i32
    return %arg0, %c0_i32 : i32, i32
  }
  func.func @transform_1(%arg0: i32) -> (i32, i32) {
    %c0_i32 = arith.constant 0 : i32
    %c0_i32_0 = arith.constant 0 : i32
    %c0_i32_1 = arith.constant 0 : i32
    return %c0_i32, %c0_i32_0 : i32, i32
  }
  func.func @transform_2(%arg0: i32) -> (i32, i32) {
    %c0_i32 = arith.constant 0 : i32
    %c0_i32_0 = arith.constant 0 : i32
    %c0_i32_1 = arith.constant 0 : i32
    return %c0_i32, %c0_i32_0 : i32, i32
  }
  func.func @transform_3(%arg0: i32) -> (i32, i32) {
    %c0_i32 = arith.constant 0 : i32
    %c0_i32_0 = arith.constant 0 : i32
    return %arg0, %c0_i32 : i32, i32
  }
}

</mosaic_0001>

<llo_original>
// kernel: tpu_custom_call.1
$region0: #{tpu_custom_call.1}
  #allocation0 [shape = 'u32[]', space=smem, size = 0x4, offset = 0x4, fixed_abs, tag = 'smem constant byte address 0x4 - core index']
  #allocation1 [shape = 'u32[72,128]{1,0:T(1,128)}', space=vmem, size = 0x9000, scoped, tag = 'internal scratch']
  %s0 = inlined_call_operand.hbm [shape: bf16[16,128], index: 0, kind: input, shape index: {}]
  %s1 = inlined_call_operand.hbm [shape: f32[1,128], index: 1, kind: input, shape index: {}]
  %s2 = inlined_call_operand.vmem [shape: f32[1,128], index: 2, kind: input, shape index: {}]
  %s3 = inlined_call_operand.hbm [shape: bf16[16,128], index: 3, kind: output, shape index: {}]
  %s4 = sld [smem:[#allocation0]]
  $region30: #{tpu_custom_call.1} parent=0
    _
  %s6 = ssub.s32 1, %s4
  %s7 = scalar_select 0, %s6, %s4
  $region1: #{tpu_custom_call.1} parent=0
    #allocation2 [shape = 'u8[4096]{0}', space=vmem, size = 0x1000, scoped, tag = 'input window, operand 0, single buffered']
    #allocation3 [shape = 's32[1]{0}', space=sflag, size = 0x4, scoped, tag = 'scoped memory for tpu_custom_call.1']
    #allocation4 [shape = 's32[1]{0}', space=sflag, size = 0x4, scoped, tag = 'scoped memory for tpu_custom_call.1']
    #allocation5 [shape = 'u8[512]{0}', space=vmem, size = 0x400, scoped, tag = 'input window, operand 1, single buffered']
    #allocation6 [shape = 's32[1]{0}', space=sflag, size = 0x4, scoped, tag = 'scoped memory for tpu_custom_call.1']
    #allocation7 [shape = 'u8[4096]{0}', space=vmem, size = 0x1000, scoped, tag = 'output window, operand 0, single buffered']
    %8 = vsyncpa [#allocation3], 0
    %9 = vsyncpa [#allocation6], 0
    %10 = vsyncpa [#allocation4], 0
    // Predicated region
    $region2: #{tpu_custom_call.1} parent=1 // pred_check
      _
    $region3: #{tpu_custom_call.1} parent=1 // pred_check_branch
      %12 = sbr.rel (0) target = $region5
    $region4: #{tpu_custom_call.1} parent=1 // pred_region
      %14 = vsyncadd [#allocation3], 0
      %s15 = sshll.u32 %s0, 4
      %s16 = int_to_ptr.hbm [resolvable:$true] %s15
      %s17 = sshll.u32 [#allocation2], 4
      %s18 = int_to_ptr.vmem [resolvable:$true] %s17
      %23 = dma.hbm_to_vmem [thread:$0]  %s16, 128, %s18, [#allocation3], 64, 64, 4
    $region5: #{tpu_custom_call.1} parent=1 // pred_fallthru
      _
    // Predicated region
    $region6: #{tpu_custom_call.1} parent=1 // pred_check
      _
    $region7: #{tpu_custom_call.1} parent=1 // pred_check_branch
      %25 = sbr.rel (0) target = $region9
    $region8: #{tpu_custom_call.1} parent=1 // pred_region
      %27 = vsyncadd [#allocation6], 0
      %s29 = sshll.u32 %s1, 4
      %s30 = int_to_ptr.hbm [resolvable:$true] %s29
      %s31 = sshll.u32 [#allocation5], 4
      %s32 = int_to_ptr.vmem [resolvable:$true] %s31
      %34 = dma.hbm_to_vmem [thread:$0]  %s30, 16, %s32, [#allocation6]
    $region9: #{tpu_custom_call.1} parent=1 // pred_fallthru
      _
    // Predicated region
    $region10: #{tpu_custom_call.1} parent=1 // pred_check
      _
    $region11: #{tpu_custom_call.1} parent=1 // pred_check_branch
      %36 = sbr.rel (0) target = $region13
    $region12: #{tpu_custom_call.1} parent=1 // pred_region
      _
    $region13: #{tpu_custom_call.1} parent=1 // pred_fallthru
      _
    // Predicated region
    $region14: #{tpu_custom_call.1} parent=1 // pred_check
      _
    $region15: #{tpu_custom_call.1} parent=1 // pred_check_branch
      %38 = sbr.rel (0) target = $region17
    $region16: #{tpu_custom_call.1} parent=1 // pred_region
      %40 = dma.done [#allocation3], 128
    $region17: #{tpu_custom_call.1} parent=1 // pred_fallthru
      _
    // Predicated region
    $region18: #{tpu_custom_call.1} parent=1 // pred_check
      _
    $region19: #{tpu_custom_call.1} parent=1 // pred_check_branch
      %42 = sbr.rel (0) target = $region21
    $region20: #{tpu_custom_call.1} parent=1 // pred_region
      %44 = dma.done [#allocation6], 16
    $region21: #{tpu_custom_call.1} parent=1 // pred_fallthru
      _
    %v45 = vld [vmem:[#allocation2] sm:$0xf]
    %v46 = vld [vmem:[#allocation2 + $0x4] sm:$0xf]
    %v47 = vunpack.c.l.bf16 %v45
    %v48 = vunpack.c.l.bf16 %v46
    %49 = vadd.xlane.f32.xlu0 %v47
    %v50 = vpop.xlane.xlu0 %49
    %51 = vadd.xlane.f32.xlu0 %v48
    %v52 = vpop.xlane.xlu0 %51
    %v53 = vrcp.pop 128.0
    %v54 = vmul.f32 128.0, %v53
    %v55 = vsub.f32 1.0, %v54
    %v56 = vmul.f32 %v53, %v55
    %v57 = vadd.f32 %v53, %v56
    %vm58 = vweird.f32 %v53
    %v59 = vsel %vm58, %v53, %v57
    %v60 = vmul.f32 %v50, %v59
    %v61 = vmul.f32 %v52, %v59
    %v62 = vsub.f32 %v47, %v60
    %v63 = vsub.f32 %v48, %v61
    %v64 = vmul.f32 %v62, %v62
    %v65 = vmul.f32 %v63, %v63
    %66 = vadd.xlane.f32.xlu0 %v64
    %v67 = vpop.xlane.xlu0 %66
    %68 = vadd.xlane.f32.xlu0 %v65
    %v69 = vpop.xlane.xlu0 %68
    %v70 = vmul.f32 %v67, %v59
    %v71 = vmul.f32 %v69, %v59
    %v72 = vadd.f32 %v70, 1e-12
    %v73 = vadd.f32 %v71, 1e-12
    %v74 = vrsqrt.pop %v72
    %v75 = vmul.f32 %v74, %v72
    %v76 = vmul.f32 %v75, %v74
    %v77 = vmul.f32 0.5, %v76
    %v78 = vsub.f32 1.5, %v77
    %v79 = vmul.f32 %v74, %v78
    %vm80 = vweird.f32 %v72
    %vm81 = vweird.f32 %v74
    %vm82 = vmor %vm80, %vm81
    %v83 = vsel %vm82, %v74, %v79
    %v84 = vrsqrt.pop %v73
    %v85 = vmul.f32 %v84, %v73
    %v86 = vmul.f32 %v85, %v84
    %v87 = vmul.f32 0.5, %v86
    %v88 = vsub.f32 1.5, %v87
    %v89 = vmul.f32 %v84, %v88
    %vm90 = vweird.f32 %v73
    %vm91 = vweird.f32 %v84
    %vm92 = vmor %vm90, %vm91
    %v93 = vsel %vm92, %v84, %v89
    %v94 = vmul.f32 %v62, %v83
    %v95 = vmul.f32 %v63, %v93
    %v96 = vld [vmem:[#allocation5] sm:$0x1]
    %v98 = vperm.slane %v96, 0
    %v100 = vmul.f32 %v94, %v98
    %v101 = vmul.f32 %v95, %v98
    %v102 = vld [vmem:[%s2] sm:$0x1]
    %v104 = vperm.slane %v102, 0
    %v106 = vadd.f32 %v100, %v104
    %v107 = vadd.f32 %v101, %v104
    %v108 = vpack.c.bf16 %v106, %v106
    %v109 = vpack.c.bf16 %v107, %v107
    %110 = vst [vmem:[#allocation7] sm:$0xf] %v108
    %111 = vst [vmem:[#allocation7 + $0x4] sm:$0xf] %v109
    // Predicated region
    $region22: #{tpu_custom_call.1} parent=1 // pred_check
      _
    $region23: #{tpu_custom_call.1} parent=1 // pred_check_branch
      %113 = sbr.rel (0) target = $region25
    $region24: #{tpu_custom_call.1} parent=1 // pred_region
      %115 = vsyncadd [#allocation4], 0
      %s116 = sshll.u32 [#allocation7], 4
      %s117 = int_to_ptr.vmem [resolvable:$true] %s116
      %s118 = sshll.u32 %s3, 4
      %s119 = int_to_ptr.hbm [resolvable:$true] %s118
      %124 = dma.vmem_to_hbm [thread:$0]  %s117, 128, %s119, [#allocation4], 64, 64, 4
    $region25: #{tpu_custom_call.1} parent=1 // pred_fallthru
      _
    // Predicated region
    $region26: #{tpu_custom_call.1} parent=1 // pred_check
      _
    $region27: #{tpu_custom_call.1} parent=1 // pred_check_branch
      %126 = sbr.rel (0) target = $region29
    $region28: #{tpu_custom_call.1} parent=1 // pred_region
      %128 = dma.done [#allocation4], 128
    $region29: #{tpu_custom_call.1} parent=1 // pred_fallthru
      _
    %129 = vsyncpa [#allocation3], 1
    %130 = vsyncpa [#allocation6], 1
    %131 = vsyncpa [#allocation4], 1

</llo_original>
